<compile_context>
chip_gen: v6e
topology: v6e:2x2x1
jax: 0.10.0
libtpu: 0.0.40
codegen_flags: <defaults>
</compile_context>

<pallas_src>
import functools
import math

import jax
import jax.numpy as jnp
from jax.experimental import pallas as pl
from jax.experimental.pallas import tpu as pltpu

EPSILON = 1e-4            # ProtGNN prototype-layer epsilon
LANE = 128                # TPU lane width
VMEM_LIMIT_BYTES = 32 * 1024 * 1024


def _round_up(x, m):
    return ((x + m - 1) // m) * m


def gnn_nc_kernel(num_classes,
                  a_ref, x_ref,
                  w1_ref, b1_ref, w2_ref, b2_ref, w3_ref, b3_ref,
                  protot_ref, psq_ref, wlast_ref,
                  emb_ref, dist_ref, logits_ref, prob_ref):
    a = a_ref[...]                       # [N, N] bf16 normalized adjacency

    # --- GCN layer 1, reassociated: (A @ x) @ W1  (F_IN < HIDDEN => fewer MACs on the N^2 term) ---
    ax = jnp.dot(a, x_ref[...], preferred_element_type=jnp.float32)           # [N, F_IN] f32
    z1 = jnp.dot(ax.astype(jnp.bfloat16), w1_ref[...],
                 preferred_element_type=jnp.float32) + b1_ref[...]
    h = jnp.maximum(z1, 0.0)                                                   # [N, H] f32

    # --- GCN layers 2..3: h = relu(A @ (h @ W) + b); layer 3 is lane-padded to 128 cols ---
    for w_ref, b_ref in ((w2_ref, b2_ref), (w3_ref, b3_ref)):
        hw = jnp.dot(h.astype(jnp.bfloat16), w_ref[...],
                     preferred_element_type=jnp.float32)
        agg = jnp.dot(a, hw.astype(jnp.bfloat16),
                      preferred_element_type=jnp.float32) + b_ref[...]
        h = jnp.maximum(agg, 0.0)

    emb_ref[...] = h                     # [N, H_PAD] lane-dense store (pad cols are exactly 0)

    # --- prototype layer: squared L2 distances (proto pre-transposed + |p|^2 precomputed) ---
    xp = jnp.dot(h.astype(jnp.bfloat16), protot_ref[...],
                 preferred_element_type=jnp.float32)                          # [N, P_PAD]
    h_sq = jnp.sum(h * h, axis=1, keepdims=True)                              # [N, 1]
    dist = -2.0 * xp + h_sq + psq_ref[...]
    dist_ref[...] = dist

    dist_c = jnp.maximum(dist, 0.0)      # guard the log against tiny negative fp cancellation
    sim = jnp.log((dist_c + 1.0) * pl.reciprocal(dist_c + EPSILON, approx=True))

    # --- last layer (no bias); wlast pad rows/cols are zero so pad logits are exactly 0 ---
    logits = jnp.dot(sim.astype(jnp.bfloat16), wlast_ref[...],
                     preferred_element_type=jnp.float32)                      # [N, C_PAD]
    logits_ref[...] = logits

    # --- softmax restricted to the first num_classes lanes ---
    col = jax.lax.broadcasted_iota(jnp.int32, logits.shape, 1)
    class_mask = col < num_classes
    masked = jnp.where(class_mask, logits, jnp.float32(-1e30))
    m = jnp.max(masked, axis=1, keepdims=True)
    e = jnp.where(class_mask, jnp.exp(masked - m), 0.0)
    prob_ref[...] = e * pl.reciprocal(jnp.sum(e, axis=1, keepdims=True), approx=True)


def prepare_params(params):
    """Host-side one-time packing: bf16 weights, lane-padded (128-wide) layer-3 /
    prototype / last-layer params, and precomputed prototype squared norms."""
    h_dim = params["w3"].shape[1]
    p_cnt, h_proto = params["proto"].shape
    assert h_proto == h_dim
    c_dim = params["wlast"].shape[1]

    h_pad = _round_up(h_dim, LANE)
    p_pad = _round_up(p_cnt, LANE)
    c_pad = _round_up(c_dim, LANE)

    w3p = jnp.zeros((params["w3"].shape[0], h_pad), jnp.float32).at[:, :h_dim].set(params["w3"])
    b3p = jnp.zeros((1, h_pad), jnp.float32).at[:, :h_dim].set(params["b3"])
    protot = jnp.zeros((h_pad, p_pad), jnp.float32).at[:h_dim, :p_cnt].set(params["proto"].T)
    psq = jnp.zeros((1, p_pad), jnp.float32).at[:, :p_cnt].set(
        jnp.sum(params["proto"] ** 2, axis=1)[None, :])
    wlastp = jnp.zeros((p_pad, c_pad), jnp.float32).at[:p_cnt, :c_dim].set(params["wlast"])

    return {
        "w1": params["w1"].astype(jnp.bfloat16),
        "b1": params["b1"].astype(jnp.float32),
        "w2": params["w2"].astype(jnp.bfloat16),
        "b2": params["b2"].astype(jnp.float32),
        "w3": w3p.astype(jnp.bfloat16),
        "b3": b3p,
        "protoT": protot.astype(jnp.bfloat16),
        "psq": psq,
        "wlast": wlastp.astype(jnp.bfloat16),
        "dims": (h_dim, p_cnt, c_dim, h_pad, p_pad, c_pad),
    }


def gnn_nets_nc_forward(a_norm, x, prep):
    n = x.shape[0]
    h_dim, p_cnt, c_dim, h_pad, p_pad, c_pad = prep["dims"]

    # bf16 MXU inputs (halves A_norm's VMEM footprint); accumulation stays f32 in-kernel.
    inputs = (a_norm.astype(jnp.bfloat16), x.astype(jnp.bfloat16),
              prep["w1"], prep["b1"], prep["w2"], prep["b2"], prep["w3"], prep["b3"],
              prep["protoT"], prep["psq"], prep["wlast"])

    out_shapes = (
        jax.ShapeDtypeStruct((n, h_pad), jnp.float32),   # emb   (lane-padded)
        jax.ShapeDtypeStruct((n, p_pad), jnp.float32),   # dist  (lane-padded)
        jax.ShapeDtypeStruct((n, c_pad), jnp.float32),   # logits (lane-padded)
        jax.ShapeDtypeStruct((n, c_pad), jnp.float32),   # prob  (lane-padded)
    )

    # Whole-array VMEM residency: fine for small/medium graphs; assert the footprint fits.
    in_bytes = sum(v.size * v.dtype.itemsize for v in inputs)
    out_bytes = sum(math.prod(s.shape) * jnp.dtype(s.dtype).itemsize for s in out_shapes)
    assert 2 * (in_bytes + out_bytes) < VMEM_LIMIT_BYTES, "graph too large for whole-array VMEM"

    vmem = pl.BlockSpec(memory_space=pltpu.MemorySpace.VMEM)

    emb_p, dist_p, logits_p, prob_p = pl.pallas_call(
        functools.partial(gnn_nc_kernel, c_dim),
        out_shape=out_shapes,
        in_specs=[vmem] * len(inputs),
        out_specs=(vmem, vmem, vmem, vmem),
        compiler_params=pltpu.CompilerParams(vmem_limit_bytes=VMEM_LIMIT_BYTES),
    )(*inputs)

    # Slice away the lane padding on the host side (kernel stores stay lane-dense).
    return (logits_p[:, :c_dim], prob_p[:, :c_dim], emb_p[:, :h_dim], dist_p[:, :p_cnt])


def gcn_normalize(adj):
    """A_norm = D^{-1/2} (A + I) D^{-1/2} (GCNConv with self-loops)."""
    n = adj.shape[0]
    a_hat = adj + jnp.eye(n, dtype=adj.dtype)
    deg = jnp.sum(a_hat, axis=1)
    d_inv_sqrt = jnp.where(deg > 0, 1.0 / jnp.sqrt(deg), 0.0)
    return a_hat * d_inv_sqrt[:, None] * d_inv_sqrt[None, :]


def make_params(key, input_dim, hidden_dim, output_dim, num_prototypes_per_class):
    ks = jax.random.split(key, 8)
    num_prototypes = output_dim * num_prototypes_per_class

    def glorot(k, fan_in, fan_out):
        lim = jnp.sqrt(6.0 / (fan_in + fan_out))
        return jax.random.uniform(k, (fan_in, fan_out), jnp.float32, -lim, lim)

    # Last layer init follows ProtGNN's set_last_layer_incorrect_connection:
    # +1.0 on the prototype's own class, -0.5 elsewhere.  Stored as [P, C].
    proto_class = jnp.repeat(jnp.arange(output_dim), num_prototypes_per_class)
    onehot = jax.nn.one_hot(proto_class, output_dim, dtype=jnp.float32)
    wlast = 1.0 * onehot + (-0.5) * (1.0 - onehot)

    return {
        "w1": glorot(ks[0], input_dim, hidden_dim),
        "b1": jnp.zeros((1, hidden_dim), jnp.float32),
        "w2": glorot(ks[1], hidden_dim, hidden_dim),
        "b2": jnp.zeros((1, hidden_dim), jnp.float32),
        "w3": glorot(ks[2], hidden_dim, hidden_dim),
        "b3": jnp.zeros((1, hidden_dim), jnp.float32),
        "proto": jax.random.uniform(ks[3], (num_prototypes, hidden_dim), jnp.float32),
        "wlast": wlast,
    }


def reference_forward(a_norm, x, p):
    """Pure-JAX f32 reference of the original module semantics."""
    h = x
    for w, b in ((p["w1"], p["b1"]), (p["w2"], p["b2"]), (p["w3"], p["b3"])):
        h = jnp.maximum(a_norm @ (h @ w) + b, 0.0)
    emb = h
    xp = h @ p["proto"].T
    dist = (-2.0 * xp + jnp.sum(h * h, axis=1, keepdims=True)
            + jnp.sum(p["proto"] ** 2, axis=1, keepdims=True).T)
    dist_c = jnp.maximum(dist, 0.0)
    sim = jnp.log((dist_c + 1.0) / (dist_c + EPSILON))
    logits = sim @ p["wlast"]
    prob = jax.nn.softmax(logits, axis=-1)
    return logits, prob, emb, dist


if __name__ == "__main__":
    key = jax.random.PRNGKey(0)
    k_x, k_adj, k_par = jax.random.split(key, 3)

    # Small node-classification problem.
    N = 16            # nodes
    F_IN = 8          # input feature dim
    HIDDEN = 32       # latent_dim for every GCN layer
    C = 3             # output classes
    PROTO_PER_CLASS = 2

    # Node features [N, F_IN]
    x = jax.random.normal(k_x, (N, F_IN), jnp.float32)

    # Random symmetric adjacency (no self loops) -> GCN-normalized dense A_norm.
    a_rand = jax.random.uniform(k_adj, (N, N), jnp.float32)
    adj = (a_rand + a_rand.T > 1.3).astype(jnp.float32)
    adj = adj * (1.0 - jnp.eye(N, dtype=jnp.float32))
    a_norm = gcn_normalize(adj)

    params = make_params(k_par, F_IN, HIDDEN, C, PROTO_PER_CLASS)
    prep = prepare_params(params)   # one-time host-side packing (bf16 + lane padding)

    logits, prob, emb, min_distances = gnn_nets_nc_forward(a_norm, x, prep)
    jax.block_until_ready((logits, prob, emb, min_distances))

    # Sanity check against a pure-JAX f32 reference.  Tolerances are loosened to cover
    # bf16 MXU inputs (f32 accumulation) and the approx EUP reciprocals in the kernel.
    r_logits, r_prob, r_emb, r_dist = reference_forward(a_norm, x, params)
    assert logits.shape == r_logits.shape and prob.shape == r_prob.shape
    assert emb.shape == r_emb.shape and min_distances.shape == r_dist.shape
    assert jnp.allclose(logits, r_logits, atol=5e-2, rtol=5e-2)
    assert jnp.allclose(prob, r_prob, atol=2e-2, rtol=5e-2)
    assert jnp.allclose(emb, r_emb, atol=2e-2, rtol=5e-2)
    assert jnp.allclose(min_distances, r_dist, atol=2.5e-1, rtol=5e-2)
    assert bool(jnp.all(jnp.isfinite(logits) & jnp.isfinite(prob)))

    print("KERNEL_OK")
</pallas_src>

<mosaic_0001>
module attributes {stable_mosaic.version = 11 : i64} {
  func.func @gnn_nc_kernel(%arg0: memref<16x16xbf16, #tpu.memory_space<vmem>>, %arg1: memref<16x8xbf16, #tpu.memory_space<vmem>>, %arg2: memref<8x32xbf16, #tpu.memory_space<vmem>>, %arg3: memref<1x32xf32, #tpu.memory_space<vmem>>, %arg4: memref<32x32xbf16, #tpu.memory_space<vmem>>, %arg5: memref<1x32xf32, #tpu.memory_space<vmem>>, %arg6: memref<32x128xbf16, #tpu.memory_space<vmem>>, %arg7: memref<1x128xf32, #tpu.memory_space<vmem>>, %arg8: memref<128x128xbf16, #tpu.memory_space<vmem>>, %arg9: memref<1x128xf32, #tpu.memory_space<vmem>>, %arg10: memref<128x128xbf16, #tpu.memory_space<vmem>>, %arg11: memref<16x128xf32, #tpu.memory_space<vmem>>, %arg12: memref<16x128xf32, #tpu.memory_space<vmem>>, %arg13: memref<16x128xf32, #tpu.memory_space<vmem>>, %arg14: memref<16x128xf32, #tpu.memory_space<vmem>>) attributes {dimension_semantics = [], scalar_prefetch = 0 : i64, scratch_operands = 0 : i64, tpu.core_type = #tpu.core_type<tc>} {
    %c0 = arith.constant 0 : index
    %c0_0 = arith.constant 0 : index
    %0 = vector.load %arg0[%c0, %c0_0] : memref<16x16xbf16, #tpu.memory_space<vmem>>, vector<16x16xbf16>
    %c0_1 = arith.constant 0 : index
    %c0_2 = arith.constant 0 : index
    %1 = vector.load %arg1[%c0_1, %c0_2] : memref<16x8xbf16, #tpu.memory_space<vmem>>, vector<16x8xbf16>
    %cst = arith.constant dense<0.000000e+00> : vector<16x8xf32>
    %2 = tpu.matmul %0, %1, %cst {dimension_numbers = #tpu.dot_dimension_numbers<[1], [0], [0], [1], [0, 0, 1, 1], [], []>} : vector<16x16xbf16>, vector<16x8xbf16>, vector<16x8xf32> -> vector<16x8xf32>
    %3 = arith.truncf %2 : vector<16x8xf32> to vector<16x8xbf16>
    %c0_3 = arith.constant 0 : index
    %c0_4 = arith.constant 0 : index
    %4 = vector.load %arg2[%c0_3, %c0_4] : memref<8x32xbf16, #tpu.memory_space<vmem>>, vector<8x32xbf16>
    %cst_5 = arith.constant dense<0.000000e+00> : vector<16x32xf32>
    %5 = tpu.matmul %3, %4, %cst_5 {dimension_numbers = #tpu.dot_dimension_numbers<[1], [0], [0], [1], [0, 0, 1, 1], [], []>} : vector<16x8xbf16>, vector<8x32xbf16>, vector<16x32xf32> -> vector<16x32xf32>
    %c0_6 = arith.constant 0 : index
    %c0_7 = arith.constant 0 : index
    %6 = vector.load %arg3[%c0_6, %c0_7] : memref<1x32xf32, #tpu.memory_space<vmem>>, vector<1x32xf32>
    %7 = vector.broadcast %6 : vector<1x32xf32> to vector<16x32xf32>
    %8 = arith.addf %5, %7 : vector<16x32xf32>
    %cst_8 = arith.constant 0.000000e+00 : f32
    %9 = vector.broadcast %cst_8 : f32 to vector<16x32xf32>
    %10 = arith.maximumf %8, %9 : vector<16x32xf32>
    %11 = arith.truncf %10 : vector<16x32xf32> to vector<16x32xbf16>
    %c0_9 = arith.constant 0 : index
    %c0_10 = arith.constant 0 : index
    %12 = vector.load %arg4[%c0_9, %c0_10] : memref<32x32xbf16, #tpu.memory_space<vmem>>, vector<32x32xbf16>
    %cst_11 = arith.constant dense<0.000000e+00> : vector<16x32xf32>
    %13 = tpu.matmul %11, %12, %cst_11 {dimension_numbers = #tpu.dot_dimension_numbers<[1], [0], [0], [1], [0, 0, 1, 1], [], []>} : vector<16x32xbf16>, vector<32x32xbf16>, vector<16x32xf32> -> vector<16x32xf32>
    %14 = arith.truncf %13 : vector<16x32xf32> to vector<16x32xbf16>
    %cst_12 = arith.constant dense<0.000000e+00> : vector<16x32xf32>
    %15 = tpu.matmul %0, %14, %cst_12 {dimension_numbers = #tpu.dot_dimension_numbers<[1], [0], [0], [1], [0, 0, 1, 1], [], []>} : vector<16x16xbf16>, vector<16x32xbf16>, vector<16x32xf32> -> vector<16x32xf32>
    %c0_13 = arith.constant 0 : index
    %c0_14 = arith.constant 0 : index
    %16 = vector.load %arg5[%c0_13, %c0_14] : memref<1x32xf32, #tpu.memory_space<vmem>>, vector<1x32xf32>
    %17 = vector.broadcast %16 : vector<1x32xf32> to vector<16x32xf32>
    %18 = arith.addf %15, %17 : vector<16x32xf32>
    %cst_15 = arith.constant 0.000000e+00 : f32
    %19 = vector.broadcast %cst_15 : f32 to vector<16x32xf32>
    %20 = arith.maximumf %18, %19 : vector<16x32xf32>
    %21 = arith.truncf %20 : vector<16x32xf32> to vector<16x32xbf16>
    %c0_16 = arith.constant 0 : index
    %c0_17 = arith.constant 0 : index
    %22 = vector.load %arg6[%c0_16, %c0_17] : memref<32x128xbf16, #tpu.memory_space<vmem>>, vector<32x128xbf16>
    %cst_18 = arith.constant dense<0.000000e+00> : vector<16x128xf32>
    %23 = tpu.matmul %21, %22, %cst_18 {dimension_numbers = #tpu.dot_dimension_numbers<[1], [0], [0], [1], [0, 0, 1, 1], [], []>} : vector<16x32xbf16>, vector<32x128xbf16>, vector<16x128xf32> -> vector<16x128xf32>
    %24 = arith.truncf %23 : vector<16x128xf32> to vector<16x128xbf16>
    %cst_19 = arith.constant dense<0.000000e+00> : vector<16x128xf32>
    %25 = tpu.matmul %0, %24, %cst_19 {dimension_numbers = #tpu.dot_dimension_numbers<[1], [0], [0], [1], [0, 0, 1, 1], [], []>} : vector<16x16xbf16>, vector<16x128xbf16>, vector<16x128xf32> -> vector<16x128xf32>
    %c0_20 = arith.constant 0 : index
    %c0_21 = arith.constant 0 : index
    %26 = vector.load %arg7[%c0_20, %c0_21] : memref<1x128xf32, #tpu.memory_space<vmem>>, vector<1x128xf32>
    %27 = vector.broadcast %26 : vector<1x128xf32> to vector<16x128xf32>
    %28 = arith.addf %25, %27 : vector<16x128xf32>
    %cst_22 = arith.constant 0.000000e+00 : f32
    %29 = vector.broadcast %cst_22 : f32 to vector<16x128xf32>
    %30 = arith.maximumf %28, %29 : vector<16x128xf32>
    %c0_23 = arith.constant 0 : index
    %c0_24 = arith.constant 0 : index
    %31 = vector.load %arg11[%c0_23, %c0_24] : memref<16x128xf32, #tpu.memory_space<vmem>>, vector<16x128xf32>
    tpu.vector_store %arg11[%c0_23, %c0_24], %30 {strides = array<i32>} : memref<16x128xf32, #tpu.memory_space<vmem>>, vector<16x128xf32>,
    %32 = arith.truncf %30 : vector<16x128xf32> to vector<16x128xbf16>
    %c0_25 = arith.constant 0 : index
    %c0_26 = arith.constant 0 : index
    %33 = vector.load %arg8[%c0_25, %c0_26] : memref<128x128xbf16, #tpu.memory_space<vmem>>, vector<128x128xbf16>
    %cst_27 = arith.constant dense<0.000000e+00> : vector<16x128xf32>
    %34 = tpu.matmul %32, %33, %cst_27 {dimension_numbers = #tpu.dot_dimension_numbers<[1], [0], [0], [1], [0, 0, 1, 1], [], []>} : vector<16x128xbf16>, vector<128x128xbf16>, vector<16x128xf32> -> vector<16x128xf32>
    %35 = arith.mulf %30, %30 : vector<16x128xf32>
    %cst_28 = arith.constant dense<0.000000e+00> : vector<16xf32>
    %36 = vector.multi_reduction <add>, %35, %cst_28 [1] : vector<16x128xf32> to vector<16xf32>
    %37 = vector.shape_cast %36 : vector<16xf32> to vector<16x1xf32>
    %cst_29 = arith.constant -2.000000e+00 : f32
    %38 = vector.broadcast %cst_29 : f32 to vector<16x128xf32>
    %39 = arith.mulf %38, %34 : vector<16x128xf32>
    %40 = vector.broadcast %37 : vector<16x1xf32> to vector<16x128xf32>
    %41 = arith.addf %39, %40 : vector<16x128xf32>
    %c0_30 = arith.constant 0 : index
    %c0_31 = arith.constant 0 : index
    %42 = vector.load %arg9[%c0_30, %c0_31] : memref<1x128xf32, #tpu.memory_space<vmem>>, vector<1x128xf32>
    %43 = vector.broadcast %42 : vector<1x128xf32> to vector<16x128xf32>
    %44 = arith.addf %41, %43 : vector<16x128xf32>
    %c0_32 = arith.constant 0 : index
    %c0_33 = arith.constant 0 : index
    %45 = vector.load %arg12[%c0_32, %c0_33] : memref<16x128xf32, #tpu.memory_space<vmem>>, vector<16x128xf32>
    tpu.vector_store %arg12[%c0_32, %c0_33], %44 {strides = array<i32>} : memref<16x128xf32, #tpu.memory_space<vmem>>, vector<16x128xf32>,
    %cst_34 = arith.constant 0.000000e+00 : f32
    %46 = vector.broadcast %cst_34 : f32 to vector<16x128xf32>
    %47 = arith.maximumf %44, %46 : vector<16x128xf32>
    %cst_35 = arith.constant 1.000000e+00 : f32
    %48 = vector.broadcast %cst_35 : f32 to vector<16x128xf32>
    %49 = arith.addf %47, %48 : vector<16x128xf32>
    %cst_36 = arith.constant 9.99999974E-5 : f32
    %50 = vector.broadcast %cst_36 : f32 to vector<16x128xf32>
    %51 = arith.addf %47, %50 : vector<16x128xf32>
    %52 = tpu.reciprocal %51 {approx = true} : vector<16x128xf32> -> vector<16x128xf32>
    %53 = arith.mulf %49, %52 : vector<16x128xf32>
    %54 = math.log %53 : vector<16x128xf32>
    %55 = arith.truncf %54 : vector<16x128xf32> to vector<16x128xbf16>
    %c0_37 = arith.constant 0 : index
    %c0_38 = arith.constant 0 : index
    %56 = vector.load %arg10[%c0_37, %c0_38] : memref<128x128xbf16, #tpu.memory_space<vmem>>, vector<128x128xbf16>
    %cst_39 = arith.constant dense<0.000000e+00> : vector<16x128xf32>
    %57 = tpu.matmul %55, %56, %cst_39 {dimension_numbers = #tpu.dot_dimension_numbers<[1], [0], [0], [1], [0, 0, 1, 1], [], []>} : vector<16x128xbf16>, vector<128x128xbf16>, vector<16x128xf32> -> vector<16x128xf32>
    %c0_40 = arith.constant 0 : index
    %c0_41 = arith.constant 0 : index
    %58 = vector.load %arg13[%c0_40, %c0_41] : memref<16x128xf32, #tpu.memory_space<vmem>>, vector<16x128xf32>
    tpu.vector_store %arg13[%c0_40, %c0_41], %57 {strides = array<i32>} : memref<16x128xf32, #tpu.memory_space<vmem>>, vector<16x128xf32>,
    %59 = tpu.iota {dimensions = array<i32: 1>} : vector<16x128xi32>
    %c3_i32 = arith.constant 3 : i32
    %60 = vector.broadcast %c3_i32 : i32 to vector<16x128xi32>
    %61 = arith.cmpi slt, %59, %60 : vector<16x128xi32>
    %cst_42 = arith.constant -1.000000e+30 : f32
    %62 = vector.broadcast %cst_42 : f32 to vector<16x128xf32>
    %63 = arith.select %61, %57, %62 : vector<16x128xi1>, vector<16x128xf32>
    %cst_43 = arith.constant dense<0xFF800000> : vector<16xf32>
    %64 = vector.multi_reduction <maximumf>, %63, %cst_43 [1] : vector<16x128xf32> to vector<16xf32>
    %65 = vector.shape_cast %64 : vector<16xf32> to vector<16x1xf32>
    %66 = vector.broadcast %65 : vector<16x1xf32> to vector<16x128xf32>
    %67 = arith.subf %63, %66 : vector<16x128xf32>
    %68 = math.exp %67 : vector<16x128xf32>
    %cst_44 = arith.constant 0.000000e+00 : f32
    %69 = vector.broadcast %cst_44 : f32 to vector<16x128xf32>
    %70 = arith.select %61, %68, %69 : vector<16x128xi1>, vector<16x128xf32>
    %cst_45 = arith.constant dense<0.000000e+00> : vector<16xf32>
    %71 = vector.multi_reduction <add>, %70, %cst_45 [1] : vector<16x128xf32> to vector<16xf32>
    %72 = vector.shape_cast %71 : vector<16xf32> to vector<16x1xf32>
    %73 = tpu.reciprocal %72 {approx = true} : vector<16x1xf32> -> vector<16x1xf32>
    %74 = vector.broadcast %73 : vector<16x1xf32> to vector<16x128xf32>
    %75 = arith.mulf %70, %74 : vector<16x128xf32>
    %c0_46 = arith.constant 0 : index
    %c0_47 = arith.constant 0 : index
    %76 = vector.load %arg14[%c0_46, %c0_47] : memref<16x128xf32, #tpu.memory_space<vmem>>, vector<16x128xf32>
    tpu.vector_store %arg14[%c0_46, %c0_47], %75 {strides = array<i32>} : memref<16x128xf32, #tpu.memory_space<vmem>>, vector<16x128xf32>,
    return
  }
}

</mosaic_0001>

<llo_original>
// kernel: tpu_custom_call.1
$region0: #{tpu_custom_call.1}
  #allocation0 [shape = 'u32[]', space=smem, size = 0x4, offset = 0x4, fixed_abs, tag = 'smem constant byte address 0x4 - core index']
  #allocation1 [shape = 'u32[144,128]{1,0:T(1,128)}', space=vmem, size = 0x12000, scoped, tag = 'internal scratch']
  %s0 = inlined_call_operand.hbm [shape: bf16[16,16], index: 0, kind: input, shape index: {}]
  %s1 = inlined_call_operand.vmem [shape: bf16[16,8], index: 1, kind: input, shape index: {}]
  %s2 = inlined_call_operand.hbm [shape: bf16[8,32], index: 2, kind: input, shape index: {}]
  %s3 = inlined_call_operand.vmem [shape: f32[1,32], index: 3, kind: input, shape index: {}]
  %s4 = inlined_call_operand.vmem [shape: bf16[32,32], index: 4, kind: input, shape index: {}]
  %s5 = inlined_call_operand.vmem [shape: f32[1,32], index: 5, kind: input, shape index: {}]
  %s6 = inlined_call_operand.hbm [shape: bf16[32,128], index: 6, kind: input, shape index: {}]
  %s7 = inlined_call_operand.vmem [shape: f32[1,128], index: 7, kind: input, shape index: {}]
  %s8 = inlined_call_operand.hbm [shape: bf16[128,128], index: 8, kind: input, shape index: {}]
  %s9 = inlined_call_operand.vmem [shape: f32[1,128], index: 9, kind: input, shape index: {}]
  %s10 = inlined_call_operand.hbm [shape: bf16[128,128], index: 10, kind: input, shape index: {}]
  %s11 = inlined_call_operand.hbm [shape: f32[16,128], index: 11, kind: output, shape index: {0}]
  %s12 = inlined_call_operand.hbm [shape: f32[16,128], index: 12, kind: output, shape index: {1}]
  %s13 = inlined_call_operand.hbm [shape: f32[16,128], index: 13, kind: output, shape index: {2}]
  %s14 = inlined_call_operand.hbm [shape: f32[16,128], index: 14, kind: output, shape index: {3}]
  %15 = xla_tuple %s11, %s12, %s13, %s14
  %s16 = sld [smem:[#allocation0]]
  $region98: #{tpu_custom_call.1} parent=0
    _
  %s18 = ssub.s32 1, %s16
  %s19 = scalar_select 0, %s18, %s16
  $region1: #{tpu_custom_call.1} parent=0
    #allocation2 [shape = 'u8[4096]{0}', space=vmem, size = 0x1000, scoped, tag = 'input window, operand 0, single buffered']
    #allocation3 [shape = 's32[1]{0}', space=sflag, size = 0x4, scoped, tag = 'scoped memory for tpu_custom_call.1']
    #allocation4 [shape = 's32[1]{0}', space=sflag, size = 0x4, scoped, tag = 'scoped memory for tpu_custom_call.1']
    #allocation5 [shape = 'u8[2048]{0}', space=vmem, size = 0x800, scoped, tag = 'input window, operand 2, single buffered']
    #allocation6 [shape = 's32[1]{0}', space=sflag, size = 0x4, scoped, tag = 'scoped memory for tpu_custom_call.1']
    #allocation7 [shape = 'u8[8192]{0}', space=vmem, size = 0x2000, scoped, tag = 'input window, operand 6, single buffered']
    #allocation8 [shape = 'u8[32768]{0}', space=vmem, size = 0x8000, scoped, tag = 'input window, operand 8, single buffered']
    #allocation9 [shape = 's32[1]{0}', space=sflag, size = 0x4, scoped, tag = 'scoped memory for tpu_custom_call.1']
    #allocation10 [shape = 'u8[32768]{0}', space=vmem, size = 0x8000, scoped, tag = 'input window, operand 10, single buffered']
    #allocation11 [shape = 'u8[8192]{0}', space=vmem, size = 0x2000, scoped, tag = 'output window, operand 0, single buffered']
    #allocation12 [shape = 'u8[8192]{0}', space=vmem, size = 0x2000, scoped, tag = 'output window, operand 1, single buffered']
    #allocation13 [shape = 's32[1]{0}', space=sflag, size = 0x4, scoped, tag = 'scoped memory for tpu_custom_call.1']
    #allocation14 [shape = 'u8[8192]{0}', space=vmem, size = 0x2000, scoped, tag = 'output window, operand 2, single buffered']
    #allocation15 [shape = 'u8[8192]{0}', space=vmem, size = 0x2000, scoped, tag = 'output window, operand 3, single buffered']
    #allocation16 [shape = 's32[1]{0}', space=sflag, size = 0x4, scoped, tag = 'scoped memory for tpu_custom_call.1']
    %20 = vsyncpa [#allocation3], 0
    %21 = vsyncpa [#allocation6], 0
    %22 = vsyncpa [#allocation9], 0
    %23 = vsyncpa [#allocation4], 0
    %24 = vsyncpa [#allocation13], 0
    %25 = vsyncpa [#allocation16], 0
    // Predicated region
    $region2: #{tpu_custom_call.1} parent=1 // pred_check
      _
    $region3: #{tpu_custom_call.1} parent=1 // pred_check_branch
      %27 = sbr.rel (0) target = $region5
    $region4: #{tpu_custom_call.1} parent=1 // pred_region
      %s29 = ssub.s32 128, 128
      %30 = vsyncadd [#allocation3], %s29
      %s31 = sshll.u32 [#allocation2], 4
      %s32 = int_to_ptr.vmem [resolvable:$true] %s31
      %37 = dma.hbm_to_vmem [thread:$0]  %s0, 128, %s32, [#allocation3], 64, 64, 4
    $region5: #{tpu_custom_call.1} parent=1 // pred_fallthru
      _
    // Predicated region
    $region6: #{tpu_custom_call.1} parent=1 // pred_check
      _
    $region7: #{tpu_custom_call.1} parent=1 // pred_check_branch
      %39 = sbr.rel (0) target = $region9
    $region8: #{tpu_custom_call.1} parent=1 // pred_region
      _
    $region9: #{tpu_custom_call.1} parent=1 // pred_fallthru
      _
    // Predicated region
    $region10: #{tpu_custom_call.1} parent=1 // pred_check
      _
    $region11: #{tpu_custom_call.1} parent=1 // pred_check_branch
      %41 = sbr.rel (0) target = $region13
    $region12: #{tpu_custom_call.1} parent=1 // pred_region
      %s43 = ssub.s32 64, 64
      %44 = vsyncadd [#allocation6], %s43
      %s46 = sshll.u32 [#allocation5], 4
      %s47 = int_to_ptr.vmem [resolvable:$true] %s46
      %49 = dma.hbm_to_vmem [thread:$0]  %s2, 64, %s47, [#allocation6]
    $region13: #{tpu_custom_call.1} parent=1 // pred_fallthru
      _
    // Predicated region
    $region14: #{tpu_custom_call.1} parent=1 // pred_check
      _
    $region15: #{tpu_custom_call.1} parent=1 // pred_check_branch
      %51 = sbr.rel (0) target = $region17
    $region16: #{tpu_custom_call.1} parent=1 // pred_region
      _
    $region17: #{tpu_custom_call.1} parent=1 // pred_fallthru
      _
    // Predicated region
    $region18: #{tpu_custom_call.1} parent=1 // pred_check
      _
    $region19: #{tpu_custom_call.1} parent=1 // pred_check_branch
      %53 = sbr.rel (0) target = $region21
    $region20: #{tpu_custom_call.1} parent=1 // pred_region
      _
    $region21: #{tpu_custom_call.1} parent=1 // pred_fallthru
      _
    // Predicated region
    $region22: #{tpu_custom_call.1} parent=1 // pred_check
      _
    $region23: #{tpu_custom_call.1} parent=1 // pred_check_branch
      %55 = sbr.rel (0) target = $region25
    $region24: #{tpu_custom_call.1} parent=1 // pred_region
      _
    $region25: #{tpu_custom_call.1} parent=1 // pred_fallthru
      _
    // Predicated region
    $region26: #{tpu_custom_call.1} parent=1 // pred_check
      _
    $region27: #{tpu_custom_call.1} parent=1 // pred_check_branch
      %57 = sbr.rel (0) target = $region29
    $region28: #{tpu_custom_call.1} parent=1 // pred_region
      %s59 = ssub.s32 256, 256
      %60 = vsyncadd [#allocation6], %s59
      %s61 = sshll.u32 [#allocation7], 4
      %s62 = int_to_ptr.vmem [resolvable:$true] %s61
      %67 = dma.hbm_to_vmem [thread:$0]  %s6, 256, %s62, [#allocation6], 64, 64, 4
    $region29: #{tpu_custom_call.1} parent=1 // pred_fallthru
      _
    // Predicated region
    $region30: #{tpu_custom_call.1} parent=1 // pred_check
      _
    $region31: #{tpu_custom_call.1} parent=1 // pred_check_branch
      %69 = sbr.rel (0) target = $region33
    $region32: #{tpu_custom_call.1} parent=1 // pred_region
      _
    $region33: #{tpu_custom_call.1} parent=1 // pred_fallthru
      _
    // Predicated region
    $region34: #{tpu_custom_call.1} parent=1 // pred_check
      _
    $region35: #{tpu_custom_call.1} parent=1 // pred_check_branch
      %71 = sbr.rel (0) target = $region37
    $region36: #{tpu_custom_call.1} parent=1 // pred_region
      %s73 = ssub.s32 1024, 1024
      %74 = vsyncadd [#allocation9], %s73
      %s75 = sshll.u32 [#allocation8], 4
      %s76 = int_to_ptr.vmem [resolvable:$true] %s75
      %81 = dma.hbm_to_vmem [thread:$0]  %s8, 1024, %s76, [#allocation9], 64, 64, 4
    $region37: #{tpu_custom_call.1} parent=1 // pred_fallthru
      _
    // Predicated region
    $region38: #{tpu_custom_call.1} parent=1 // pred_check
      _
    $region39: #{tpu_custom_call.1} parent=1 // pred_check_branch
      %83 = sbr.rel (0) target = $region41
    $region40: #{tpu_custom_call.1} parent=1 // pred_region
      _
    $region41: #{tpu_custom_call.1} parent=1 // pred_fallthru
      _
    // Predicated region
    $region42: #{tpu_custom_call.1} parent=1 // pred_check
      _
    $region43: #{tpu_custom_call.1} parent=1 // pred_check_branch
      %85 = sbr.rel (0) target = $region45
    $region44: #{tpu_custom_call.1} parent=1 // pred_region
      %s87 = ssub.s32 1024, 1024
      %88 = vsyncadd [#allocation9], %s87
      %s89 = sshll.u32 [#allocation10], 4
      %s90 = int_to_ptr.vmem [resolvable:$true] %s89
      %95 = dma.hbm_to_vmem [thread:$0]  %s10, 1024, %s90, [#allocation9], 64, 64, 4
    $region45: #{tpu_custom_call.1} parent=1 // pred_fallthru
      _
    // Predicated region
    $region46: #{tpu_custom_call.1} parent=1 // pred_check
      _
    $region47: #{tpu_custom_call.1} parent=1 // pred_check_branch
      %97 = sbr.rel (0) target = $region49
    $region48: #{tpu_custom_call.1} parent=1 // pred_region
      %98 = dma.done [#allocation3], 128
    $region49: #{tpu_custom_call.1} parent=1 // pred_fallthru
      _
    // Predicated region
    $region50: #{tpu_custom_call.1} parent=1 // pred_check
      _
    $region51: #{tpu_custom_call.1} parent=1 // pred_check_branch
      %100 = sbr.rel (0) target = $region53
    $region52: #{tpu_custom_call.1} parent=1 // pred_region
      %101 = dma.done [#allocation6], 64
    $region53: #{tpu_custom_call.1} parent=1 // pred_fallthru
      _
    // Predicated region
    $region54: #{tpu_custom_call.1} parent=1 // pred_check
      _
    $region55: #{tpu_custom_call.1} parent=1 // pred_check_branch
      %103 = sbr.rel (0) target = $region57
    $region56: #{tpu_custom_call.1} parent=1 // pred_region
      %104 = dma.done [#allocation6], 256
    $region57: #{tpu_custom_call.1} parent=1 // pred_fallthru
      _
    // Predicated region
    $region58: #{tpu_custom_call.1} parent=1 // pred_check
      _
    $region59: #{tpu_custom_call.1} parent=1 // pred_check_branch
      %106 = sbr.rel (0) target = $region61
    $region60: #{tpu_custom_call.1} parent=1 // pred_region
      %107 = dma.done [#allocation9], 1024
    $region61: #{tpu_custom_call.1} parent=1 // pred_fallthru
      _
    // Predicated region
    $region62: #{tpu_custom_call.1} parent=1 // pred_check
      _
    $region63: #{tpu_custom_call.1} parent=1 // pred_check_branch
      %109 = sbr.rel (0) target = $region65
    $region64: #{tpu_custom_call.1} parent=1 // pred_region
      %110 = dma.done [#allocation9], 1024
    $region65: #{tpu_custom_call.1} parent=1 // pred_fallthru
      _
    %v112 = vld [vmem:[#allocation2] sm:$0xf]
    %v113 = vld [vmem:[#allocation2 + $0x4] sm:$0xf]
    %v114 = vld [vmem:[%s1] sm:$0xf]
    %v115 = vld [vmem:[%s1 + $0x4] sm:$0xf]
    %v118 = vunpack.c.l.b16 %v112
    %v119 = vunpack.c.l.b16 %v113
    %v120 = vpack.c.b16 %v119, %v118
    %v123 = vunpack.c.l.b16 %v114
    %v124 = vunpack.c.l.b16 %v115
    %v125 = vpack.c.b16 %v124, %v123
    %vm127 = vcmask 130048
    %v129 = vsel %vm127, %v120, 0
    %131 = vmatprep.subr.bf16.mxu0 0
    %132 = vmatpush1.bf16.msra.mxu0 0
    %133 = vmatprep.subr.bf16.mxu0 0
    %134 = vmatpush1.bf16.msra.mxu0 0
    %135 = vmatprep.subr.bf16.mxu0 0
    %136 = vmatpush1.bf16.msra.mxu0 0
    %137 = vmatprep.subr.bf16.mxu0 0
    %138 = vmatpush1.bf16.msra.mxu0 0
    %139 = vmatprep.subr.bf16.mxu0 0
    %140 = vmatpush1.bf16.msra.mxu0 0
    %141 = vmatprep.subr.bf16.mxu0 0
    %142 = vmatpush1.bf16.msra.mxu0 0
    %143 = vmatprep.subr.bf16.mxu0 0
    %144 = vmatpush1.bf16.msra.mxu0 0
    %145 = vmatprep.subr.bf16.mxu0 0
    %146 = vmatpush1.bf16.msra.mxu0 %v125
    %147 = vmatprep.subr.bf16.mxu0 0
    %148 = vmatpush2.bf16.msra.mxu0 0
    %149 = vmatprep.subr.bf16.mxu0 0
    %150 = vmatpush2.bf16.msra.mxu0 0
    %151 = vmatprep.subr.bf16.mxu0 0
    %152 = vmatpush2.bf16.msra.mxu0 0
    %153 = vmatprep.subr.bf16.mxu0 0
    %154 = vmatpush2.bf16.msra.mxu0 0
    %155 = vmatprep.subr.bf16.mxu0 0
    %156 = vmatpush2.bf16.msra.mxu0 0
    %157 = vmatprep.subr.bf16.mxu0 0
    %158 = vmatpush2.bf16.msra.mxu0 0
    %159 = vmatprep.subr.bf16.mxu0 0
    %160 = vmatpush2.bf16.msra.mxu0 0
    %161 = vmatprep.subr.bf16.mxu0 0
    %162 = vmatpush2.bf16.msra.mxu0 0
    %163 = vmatprep.mubr.bf16.mxu0 0
    %164 = vmatmul.mubr.bf16.gmra.mxu0 %v129
    %v165 = vpop.f32.mrf.mxu0
    %v166 = vadd.f32 0.0, %v165
    %v167 = vpop.f32.mrf.mxu0
    %v168 = vpop.f32.mrf.mxu0
    %v169 = vadd.f32 0.0, %v168
    %v170 = vpop.f32.mrf.mxu0
    %171 = vdwg.mxu0
    %v172 = vpack.c.bf16 %v169, %v166
    %v173 = vld [vmem:[#allocation5] sm:$0xf]
    %v174 = vld [vmem:[%s3] sm:$0x1]
    %v176 = vlaneseq
    %v177 = vshrl.u32 %v176, 7
    %v178 = vsub.s32 0, %v177
    %v179 = vrot.slane %v174, %v178
    %vm181 = vcmask 64512
    %v183 = vsel %vm181, %v172, 0
    %vm185 = vcmask 1043456
    %v187 = vsel %vm185, %v173, 0
    %189 = vmatprep.subr.bf16.mxu0 0
    %190 = vmatpush1.bf16.msra.mxu0 0
    %191 = vmatprep.subr.bf16.mxu0 0
    %192 = vmatpush1.bf16.msra.mxu0 0
    %193 = vmatprep.subr.bf16.mxu0 0
    %194 = vmatpush1.bf16.msra.mxu0 0
    %195 = vmatprep.subr.bf16.mxu0 0
    %196 = vmatpush1.bf16.msra.mxu0 0
    %197 = vmatprep.subr.bf16.mxu0 0
    %198 = vmatpush1.bf16.msra.mxu0 0
    %199 = vmatprep.subr.bf16.mxu0 0
    %200 = vmatpush1.bf16.msra.mxu0 0
    %201 = vmatprep.subr.bf16.mxu0 0
    %202 = vmatpush1.bf16.msra.mxu0 0
    %203 = vmatprep.subr.bf16.mxu0 0
    %204 = vmatpush1.bf16.msra.mxu0 %v187
    %205 = vmatprep.subr.bf16.mxu0 0
    %206 = vmatpush2.bf16.msra.mxu0 0
    %207 = vmatprep.subr.bf16.mxu0 0
    %208 = vmatpush2.bf16.msra.mxu0 0
    %209 = vmatprep.subr.bf16.mxu0 0
    %210 = vmatpush2.bf16.msra.mxu0 0
    %211 = vmatprep.subr.bf16.mxu0 0
    %212 = vmatpush2.bf16.msra.mxu0 0
    %213 = vmatprep.subr.bf16.mxu0 0
    %214 = vmatpush2.bf16.msra.mxu0 0
    %215 = vmatprep.subr.bf16.mxu0 0
    %216 = vmatpush2.bf16.msra.mxu0 0
    %217 = vmatprep.subr.bf16.mxu0 0
    %218 = vmatpush2.bf16.msra.mxu0 0
    %219 = vmatprep.subr.bf16.mxu0 0
    %220 = vmatpush2.bf16.msra.mxu0 0
    %221 = vmatprep.mubr.bf16.mxu0 0
    %222 = vmatmul.mubr.bf16.gmra.mxu0 %v183
    %v223 = vpop.f32.mrf.mxu0
    %v224 = vadd.f32 %v179, %v223
    %v225 = vpop.f32.mrf.mxu0
    %v226 = vpop.f32.mrf.mxu0
    %v227 = vadd.f32 %v179, %v226
    %v228 = vpop.f32.mrf.mxu0
    %229 = vdwg.mxu0
    %v230 = vmax.f32 %v224, 0.0
    %v231 = vmax.f32 %v227, 0.0
    %v232 = vpack.c.bf16 %v231, %v230
    %v233 = vld [vmem:[%s4] sm:$0xf]
    %v234 = vld [vmem:[%s4 + $0x4] sm:$0xf]
    %v235 = vld [vmem:[%s4 + $0x8] sm:$0xf]
    %v236 = vld [vmem:[%s4 + $0xc] sm:$0xf]
    %v241 = vunpack.c.l.b16 %v233
    %v242 = vunpack.c.l.b16 %v234
    %v243 = vunpack.c.l.b16 %v235
    %v244 = vunpack.c.l.b16 %v236
    %v245 = vpack.c.b16 %v242, %v241
    %v246 = vpack.c.b16 %v244, %v243
    %vm249 = vcmask 261120
    %v251 = vsel %vm249, %v232, 0
    %253 = vmatprep.subr.bf16.mxu0 0
    %254 = vmatpush1.bf16.msra.mxu0 0
    %255 = vmatprep.subr.bf16.mxu0 0
    %256 = vmatpush1.bf16.msra.mxu0 0
    %257 = vmatprep.subr.bf16.mxu0 0
    %258 = vmatpush1.bf16.msra.mxu0 0
    %259 = vmatprep.subr.bf16.mxu0 0
    %260 = vmatpush1.bf16.msra.mxu0 0
    %261 = vmatprep.subr.bf16.mxu0 0
    %262 = vmatpush1.bf16.msra.mxu0 0
    %263 = vmatprep.subr.bf16.mxu0 0
    %264 = vmatpush1.bf16.msra.mxu0 0
    %265 = vmatprep.subr.bf16.mxu0 0
    %266 = vmatpush1.bf16.msra.mxu0 %v246
    %267 = vmatprep.subr.bf16.mxu0 0
    %268 = vmatpush1.bf16.msra.mxu0 %v245
    %269 = vmatprep.subr.bf16.mxu0 0
    %270 = vmatpush2.bf16.msra.mxu0 0
    %271 = vmatprep.subr.bf16.mxu0 0
    %272 = vmatpush2.bf16.msra.mxu0 0
    %273 = vmatprep.subr.bf16.mxu0 0
    %274 = vmatpush2.bf16.msra.mxu0 0
    %275 = vmatprep.subr.bf16.mxu0 0
    %276 = vmatpush2.bf16.msra.mxu0 0
    %277 = vmatprep.subr.bf16.mxu0 0
    %278 = vmatpush2.bf16.msra.mxu0 0
    %279 = vmatprep.subr.bf16.mxu0 0
    %280 = vmatpush2.bf16.msra.mxu0 0
    %281 = vmatprep.subr.bf16.mxu0 0
    %282 = vmatpush2.bf16.msra.mxu0 0
    %283 = vmatprep.subr.bf16.mxu0 0
    %284 = vmatpush2.bf16.msra.mxu0 0
    %285 = vmatprep.mubr.bf16.mxu0 0
    %286 = vmatmul.mubr.bf16.gmra.mxu0 %v251
    %v287 = vpop.f32.mrf.mxu0
    %v288 = vadd.f32 0.0, %v287
    %v289 = vpop.f32.mrf.mxu0
    %v290 = vpop.f32.mrf.mxu0
    %v291 = vadd.f32 0.0, %v290
    %v292 = vpop.f32.mrf.mxu0
    %293 = vdwg.mxu0
    %v294 = vpack.c.bf16 %v291, %v288
    %v295 = vld [vmem:[%s5] sm:$0x1]
    %v297 = vlaneseq
    %v298 = vshrl.u32 %v297, 7
    %v299 = vsub.s32 0, %v298
    %v300 = vrot.slane %v295, %v299
    %302 = vmatprep.subr.bf16.mxu0 0
    %303 = vmatpush1.bf16.msra.mxu0 0
    %304 = vmatprep.subr.bf16.mxu0 0
    %305 = vmatpush1.bf16.msra.mxu0 0
    %306 = vmatprep.subr.bf16.mxu0 0
    %307 = vmatpush1.bf16.msra.mxu0 0
    %308 = vmatprep.subr.bf16.mxu0 0
    %309 = vmatpush1.bf16.msra.mxu0 0
    %310 = vmatprep.subr.bf16.mxu0 0
    %311 = vmatpush1.bf16.msra.mxu0 0
    %312 = vmatprep.subr.bf16.mxu0 0
    %313 = vmatpush1.bf16.msra.mxu0 0
    %314 = vmatprep.subr.bf16.mxu0 0
    %315 = vmatpush1.bf16.msra.mxu0 0
    %316 = vmatprep.subr.bf16.mxu0 0
    %317 = vmatpush1.bf16.msra.mxu0 %v294
    %318 = vmatprep.subr.bf16.mxu0 0
    %319 = vmatpush2.bf16.msra.mxu0 0
    %320 = vmatprep.subr.bf16.mxu0 0
    %321 = vmatpush2.bf16.msra.mxu0 0
    %322 = vmatprep.subr.bf16.mxu0 0
    %323 = vmatpush2.bf16.msra.mxu0 0
    %324 = vmatprep.subr.bf16.mxu0 0
    %325 = vmatpush2.bf16.msra.mxu0 0
    %326 = vmatprep.subr.bf16.mxu0 0
    %327 = vmatpush2.bf16.msra.mxu0 0
    %328 = vmatprep.subr.bf16.mxu0 0
    %329 = vmatpush2.bf16.msra.mxu0 0
    %330 = vmatprep.subr.bf16.mxu0 0
    %331 = vmatpush2.bf16.msra.mxu0 0
    %332 = vmatprep.subr.bf16.mxu0 0
    %333 = vmatpush2.bf16.msra.mxu0 0
    %334 = vmatprep.mubr.bf16.mxu0 0
    %335 = vmatmul.mubr.bf16.gmra.mxu0 %v129
    %v336 = vpop.f32.mrf.mxu0
    %v337 = vadd.f32 %v300, %v336
    %v338 = vpop.f32.mrf.mxu0
    %v339 = vpop.f32.mrf.mxu0
    %v340 = vadd.f32 %v300, %v339
    %v341 = vpop.f32.mrf.mxu0
    %342 = vdwg.mxu0
    %v343 = vmax.f32 %v337, 0.0
    %v344 = vmax.f32 %v340, 0.0
    %v345 = vpack.c.bf16 %v344, %v343
    %v346 = vld [vmem:[#allocation7] sm:$0xf]
    %v347 = vld [vmem:[#allocation7 + $0x4] sm:$0xf]
    %v348 = vld [vmem:[#allocation7 + $0x8] sm:$0xf]
    %v349 = vld [vmem:[#allocation7 + $0xc] sm:$0xf]
    %v354 = vunpack.c.l.b16 %v346
    %v355 = vunpack.c.l.b16 %v347
    %v356 = vunpack.c.l.b16 %v348
    %v357 = vunpack.c.l.b16 %v349
    %v358 = vpack.c.b16 %v355, %v354
    %v359 = vpack.c.b16 %v357, %v356
    %v363 = vsel %vm249, %v345, 0
    %365 = vmatprep.subr.bf16.mxu0 0
    %366 = vmatpush1.bf16.msra.mxu0 0
    %367 = vmatprep.subr.bf16.mxu0 0
    %368 = vmatpush1.bf16.msra.mxu0 0
    %369 = vmatprep.subr.bf16.mxu0 0
    %370 = vmatpush1.bf16.msra.mxu0 0
    %371 = vmatprep.subr.bf16.mxu0 0
    %372 = vmatpush1.bf16.msra.mxu0 0
    %373 = vmatprep.subr.bf16.mxu0 0
    %374 = vmatpush1.bf16.msra.mxu0 0
    %375 = vmatprep.subr.bf16.mxu0 0
    %376 = vmatpush1.bf16.msra.mxu0 0
    %377 = vmatprep.subr.bf16.mxu0 0
    %378 = vmatpush1.bf16.msra.mxu0 %v359
    %379 = vmatprep.subr.bf16.mxu0 0
    %380 = vmatpush1.bf16.msra.mxu0 %v358
    %381 = vmatprep.subr.bf16.mxu0 0
    %382 = vmatpush2.bf16.msra.mxu0 0
    %383 = vmatprep.subr.bf16.mxu0 0
    %384 = vmatpush2.bf16.msra.mxu0 0
    %385 = vmatprep.subr.bf16.mxu0 0
    %386 = vmatpush2.bf16.msra.mxu0 0
    %387 = vmatprep.subr.bf16.mxu0 0
    %388 = vmatpush2.bf16.msra.mxu0 0
    %389 = vmatprep.subr.bf16.mxu0 0
    %390 = vmatpush2.bf16.msra.mxu0 0
    %391 = vmatprep.subr.bf16.mxu0 0
    %392 = vmatpush2.bf16.msra.mxu0 0
    %393 = vmatprep.subr.bf16.mxu0 0
    %394 = vmatpush2.bf16.msra.mxu0 0
    %395 = vmatprep.subr.bf16.mxu0 0
    %396 = vmatpush2.bf16.msra.mxu0 0
    %397 = vmatprep.mubr.bf16.mxu0 0
    %398 = vmatmul.mubr.bf16.gmra.mxu0 %v363
    %v399 = vpop.f32.mrf.mxu0
    %v400 = vadd.f32 0.0, %v399
    %v401 = vpop.f32.mrf.mxu0
    %v402 = vpop.f32.mrf.mxu0
    %v403 = vadd.f32 0.0, %v402
    %v404 = vpop.f32.mrf.mxu0
    %405 = vdwg.mxu0
    %v406 = vpack.c.bf16 %v403, %v400
    %v407 = vld [vmem:[%s7] sm:$0x1]
    %v409 = vlaneseq
    %v410 = vshrl.u32 %v409, 7
    %v411 = vsub.s32 0, %v410
    %v412 = vrot.slane %v407, %v411
    %414 = vmatprep.subr.bf16.mxu0 0
    %415 = vmatpush1.bf16.msra.mxu0 0
    %416 = vmatprep.subr.bf16.mxu0 0
    %417 = vmatpush1.bf16.msra.mxu0 0
    %418 = vmatprep.subr.bf16.mxu0 0
    %419 = vmatpush1.bf16.msra.mxu0 0
    %420 = vmatprep.subr.bf16.mxu0 0
    %421 = vmatpush1.bf16.msra.mxu0 0
    %422 = vmatprep.subr.bf16.mxu0 0
    %423 = vmatpush1.bf16.msra.mxu0 0
    %424 = vmatprep.subr.bf16.mxu0 0
    %425 = vmatpush1.bf16.msra.mxu0 0
    %426 = vmatprep.subr.bf16.mxu0 0
    %427 = vmatpush1.bf16.msra.mxu0 0
    %428 = vmatprep.subr.bf16.mxu0 0
    %429 = vmatpush1.bf16.msra.mxu0 %v406
    %430 = vmatprep.subr.bf16.mxu0 0
    %431 = vmatpush2.bf16.msra.mxu0 0
    %432 = vmatprep.subr.bf16.mxu0 0
    %433 = vmatpush2.bf16.msra.mxu0 0
    %434 = vmatprep.subr.bf16.mxu0 0
    %435 = vmatpush2.bf16.msra.mxu0 0
    %436 = vmatprep.subr.bf16.mxu0 0
    %437 = vmatpush2.bf16.msra.mxu0 0
    %438 = vmatprep.subr.bf16.mxu0 0
    %439 = vmatpush2.bf16.msra.mxu0 0
    %440 = vmatprep.subr.bf16.mxu0 0
    %441 = vmatpush2.bf16.msra.mxu0 0
    %442 = vmatprep.subr.bf16.mxu0 0
    %443 = vmatpush2.bf16.msra.mxu0 0
    %444 = vmatprep.subr.bf16.mxu0 0
    %445 = vmatpush2.bf16.msra.mxu0 0
    %446 = vmatprep.mubr.bf16.mxu0 0
    %447 = vmatmul.mubr.bf16.gmra.mxu0 %v129
    %v448 = vpop.f32.mrf.mxu0
    %v449 = vadd.f32 %v412, %v448
    %v450 = vpop.f32.mrf.mxu0
    %v451 = vpop.f32.mrf.mxu0
    %v452 = vadd.f32 %v412, %v451
    %v453 = vpop.f32.mrf.mxu0
    %454 = vdwg.mxu0
    %v455 = vmax.f32 %v449, 0.0
    %v456 = vmax.f32 %v452, 0.0
    %457 = vst [vmem:[#allocation11] sm:$0xff] %v455
    %458 = vst [vmem:[#allocation11 + $0x8] sm:$0xff] %v456
    %v459 = vpack.c.bf16 %v456, %v455
    %v460 = vld [vmem:[#allocation8] sm:$0xf]
    %v461 = vld [vmem:[#allocation8 + $0x4] sm:$0xf]
    %v462 = vld [vmem:[#allocation8 + $0x8] sm:$0xf]
    %v463 = vld [vmem:[#allocation8 + $0xc] sm:$0xf]
    %v464 = vld [vmem:[#allocation8 + $0x10] sm:$0xf]
    %v465 = vld [vmem:[#allocation8 + $0x14] sm:$0xf]
    %v466 = vld [vmem:[#allocation8 + $0x18] sm:$0xf]
    %v467 = vld [vmem:[#allocation8 + $0x1c] sm:$0xf]
    %v468 = vld [vmem:[#allocation8 + $0x20] sm:$0xf]
    %v469 = vld [vmem:[#allocation8 + $0x24] sm:$0xf]
    %v470 = vld [vmem:[#allocation8 + $0x28] sm:$0xf]
    %v471 = vld [vmem:[#allocation8 + $0x2c] sm:$0xf]
    %v472 = vld [vmem:[#allocation8 + $0x30] sm:$0xf]
    %v473 = vld [vmem:[#allocation8 + $0x34] sm:$0xf]
    %v474 = vld [vmem:[#allocation8 + $0x38] sm:$0xf]
    %v475 = vld [vmem:[#allocation8 + $0x3c] sm:$0xf]
    %v492 = vunpack.c.l.b16 %v460
    %v493 = vunpack.c.l.b16 %v461
    %v494 = vunpack.c.l.b16 %v462
    %v495 = vunpack.c.l.b16 %v463
    %v496 = vunpack.c.l.b16 %v464
    %v497 = vunpack.c.l.b16 %v465
    %v498 = vunpack.c.l.b16 %v466
    %v499 = vunpack.c.l.b16 %v467
    %v500 = vunpack.c.l.b16 %v468
    %v501 = vunpack.c.l.b16 %v469
    %v502 = vunpack.c.l.b16 %v470
    %v503 = vunpack.c.l.b16 %v471
    %v504 = vunpack.c.l.b16 %v472
    %v505 = vunpack.c.l.b16 %v473
    %v506 = vunpack.c.l.b16 %v474
    %v507 = vunpack.c.l.b16 %v475
    %v508 = vpack.c.b16 %v493, %v492
    %v509 = vpack.c.b16 %v495, %v494
    %v510 = vpack.c.b16 %v497, %v496
    %v511 = vpack.c.b16 %v499, %v498
    %v512 = vpack.c.b16 %v501, %v500
    %v513 = vpack.c.b16 %v503, %v502
    %v514 = vpack.c.b16 %v505, %v504
    %v515 = vpack.c.b16 %v507, %v506
    %524 = vmatprep.subr.bf16.mxu0 0
    %525 = vmatpush1.bf16.msra.mxu0 %v515
    %526 = vmatprep.subr.bf16.mxu0 0
    %527 = vmatpush1.bf16.msra.mxu0 %v514
    %528 = vmatprep.subr.bf16.mxu0 0
    %529 = vmatpush1.bf16.msra.mxu0 %v513
    %530 = vmatprep.subr.bf16.mxu0 0
    %531 = vmatpush1.bf16.msra.mxu0 %v512
    %532 = vmatprep.subr.bf16.mxu0 0
    %533 = vmatpush1.bf16.msra.mxu0 %v511
    %534 = vmatprep.subr.bf16.mxu0 0
    %535 = vmatpush1.bf16.msra.mxu0 %v510
    %536 = vmatprep.subr.bf16.mxu0 0
    %537 = vmatpush1.bf16.msra.mxu0 %v509
    %538 = vmatprep.subr.bf16.mxu0 0
    %539 = vmatpush1.bf16.msra.mxu0 %v508
    %540 = vmatprep.subr.bf16.mxu0 0
    %541 = vmatpush2.bf16.msra.mxu0 0
    %542 = vmatprep.subr.bf16.mxu0 0
    %543 = vmatpush2.bf16.msra.mxu0 0
    %544 = vmatprep.subr.bf16.mxu0 0
    %545 = vmatpush2.bf16.msra.mxu0 0
    %546 = vmatprep.subr.bf16.mxu0 0
    %547 = vmatpush2.bf16.msra.mxu0 0
    %548 = vmatprep.subr.bf16.mxu0 0
    %549 = vmatpush2.bf16.msra.mxu0 0
    %550 = vmatprep.subr.bf16.mxu0 0
    %551 = vmatpush2.bf16.msra.mxu0 0
    %552 = vmatprep.subr.bf16.mxu0 0
    %553 = vmatpush2.bf16.msra.mxu0 0
    %554 = vmatprep.subr.bf16.mxu0 0
    %555 = vmatpush2.bf16.msra.mxu0 0
    %556 = vmatprep.mubr.bf16.mxu0 0
    %557 = vmatmul.mubr.bf16.gmra.mxu0 %v459
    %v558 = vpop.f32.mrf.mxu0
    %v559 = vadd.f32 0.0, %v558
    %v560 = vpop.f32.mrf.mxu0
    %v561 = vpop.f32.mrf.mxu0
    %v562 = vadd.f32 0.0, %v561
    %v563 = vpop.f32.mrf.mxu0
    %564 = vdwg.mxu0
    %v565 = vmul.f32 %v455, %v455
    %v566 = vmul.f32 %v456, %v456
    %567 = vadd.xlane.f32.xlu0 %v565
    %v568 = vpop.xlane.xlu0 %567
    %569 = vadd.xlane.f32.xlu0 %v566
    %v570 = vpop.xlane.xlu0 %569
    %v571 = vmul.f32 %v559, -2.0
    %v572 = vmul.f32 %v562, -2.0
    %v573 = vadd.f32 %v571, %v568
    %v574 = vadd.f32 %v572, %v570
    %v575 = vld [vmem:[%s9] sm:$0x1]
    %v577 = vlaneseq
    %v578 = vshrl.u32 %v577, 7
    %v579 = vsub.s32 0, %v578
    %v580 = vrot.slane %v575, %v579
    %v582 = vadd.f32 %v573, %v580
    %v583 = vadd.f32 %v574, %v580
    %584 = vst [vmem:[#allocation12] sm:$0xff] %v582
    %585 = vst [vmem:[#allocation12 + $0x8] sm:$0xff] %v583
    %v586 = vmax.f32 %v582, 0.0
    %v587 = vmax.f32 %v583, 0.0
    %v588 = vadd.f32 %v586, 1.0
    %v589 = vadd.f32 %v587, 1.0
    %v590 = vadd.f32 %v586, 0.0001
    %v591 = vadd.f32 %v587, 0.0001
    %v592 = vrcp.pop %v590
    %v593 = vrcp.pop %v591
    %v594 = vmul.f32 %v588, %v592
    %v595 = vmul.f32 %v589, %v593
    %v596 = vlog2.pop %v594
    %v597 = vmul.f32 %v596, 0.6931472
    %v598 = vlog2.pop %v595
    %v599 = vmul.f32 %v598, 0.6931472
    %v600 = vpack.c.bf16 %v599, %v597
    %v601 = vld [vmem:[#allocation10] sm:$0xf]
    %v602 = vld [vmem:[#allocation10 + $0x4] sm:$0xf]
    %v603 = vld [vmem:[#allocation10 + $0x8] sm:$0xf]
    %v604 = vld [vmem:[#allocation10 + $0xc] sm:$0xf]
    %v605 = vld [vmem:[#allocation10 + $0x10] sm:$0xf]
    %v606 = vld [vmem:[#allocation10 + $0x14] sm:$0xf]
    %v607 = vld [vmem:[#allocation10 + $0x18] sm:$0xf]
    %v608 = vld [vmem:[#allocation10 + $0x1c] sm:$0xf]
    %v609 = vld [vmem:[#allocation10 + $0x20] sm:$0xf]
    %v610 = vld [vmem:[#allocation10 + $0x24] sm:$0xf]
    %v611 = vld [vmem:[#allocation10 + $0x28] sm:$0xf]
    %v612 = vld [vmem:[#allocation10 + $0x2c] sm:$0xf]
    %v613 = vld [vmem:[#allocation10 + $0x30] sm:$0xf]
    %v614 = vld [vmem:[#allocation10 + $0x34] sm:$0xf]
    %v615 = vld [vmem:[#allocation10 + $0x38] sm:$0xf]
    %v616 = vld [vmem:[#allocation10 + $0x3c] sm:$0xf]
    %v633 = vunpack.c.l.b16 %v601
    %v634 = vunpack.c.l.b16 %v602
    %v635 = vunpack.c.l.b16 %v603
    %v636 = vunpack.c.l.b16 %v604
    %v637 = vunpack.c.l.b16 %v605
    %v638 = vunpack.c.l.b16 %v606
    %v639 = vunpack.c.l.b16 %v607
    %v640 = vunpack.c.l.b16 %v608
    %v641 = vunpack.c.l.b16 %v609
    %v642 = vunpack.c.l.b16 %v610
    %v643 = vunpack.c.l.b16 %v611
    %v644 = vunpack.c.l.b16 %v612
    %v645 = vunpack.c.l.b16 %v613
    %v646 = vunpack.c.l.b16 %v614
    %v647 = vunpack.c.l.b16 %v615
    %v648 = vunpack.c.l.b16 %v616
    %v649 = vpack.c.b16 %v634, %v633
    %v650 = vpack.c.b16 %v636, %v635
    %v651 = vpack.c.b16 %v638, %v637
    %v652 = vpack.c.b16 %v640, %v639
    %v653 = vpack.c.b16 %v642, %v641
    %v654 = vpack.c.b16 %v644, %v643
    %v655 = vpack.c.b16 %v646, %v645
    %v656 = vpack.c.b16 %v648, %v647
    %665 = vmatprep.subr.bf16.mxu0 0
    %666 = vmatpush1.bf16.msra.mxu0 %v656
    %667 = vmatprep.subr.bf16.mxu0 0
    %668 = vmatpush1.bf16.msra.mxu0 %v655
    %669 = vmatprep.subr.bf16.mxu0 0
    %670 = vmatpush1.bf16.msra.mxu0 %v654
    %671 = vmatprep.subr.bf16.mxu0 0
    %672 = vmatpush1.bf16.msra.mxu0 %v653
    %673 = vmatprep.subr.bf16.mxu0 0
    %674 = vmatpush1.bf16.msra.mxu0 %v652
    %675 = vmatprep.subr.bf16.mxu0 0
    %676 = vmatpush1.bf16.msra.mxu0 %v651
    %677 = vmatprep.subr.bf16.mxu0 0
    %678 = vmatpush1.bf16.msra.mxu0 %v650
    %679 = vmatprep.subr.bf16.mxu0 0
    %680 = vmatpush1.bf16.msra.mxu0 %v649
    %681 = vmatprep.subr.bf16.mxu0 0
    %682 = vmatpush2.bf16.msra.mxu0 0
    %683 = vmatprep.subr.bf16.mxu0 0
    %684 = vmatpush2.bf16.msra.mxu0 0
    %685 = vmatprep.subr.bf16.mxu0 0
    %686 = vmatpush2.bf16.msra.mxu0 0
    %687 = vmatprep.subr.bf16.mxu0 0
    %688 = vmatpush2.bf16.msra.mxu0 0
    %689 = vmatprep.subr.bf16.mxu0 0
    %690 = vmatpush2.bf16.msra.mxu0 0
    %691 = vmatprep.subr.bf16.mxu0 0
    %692 = vmatpush2.bf16.msra.mxu0 0
    %693 = vmatprep.subr.bf16.mxu0 0
    %694 = vmatpush2.bf16.msra.mxu0 0
    %695 = vmatprep.subr.bf16.mxu0 0
    %696 = vmatpush2.bf16.msra.mxu0 0
    %697 = vmatprep.mubr.bf16.mxu0 0
    %698 = vmatmul.mubr.bf16.gmra.mxu0 %v600
    %v699 = vpop.f32.mrf.mxu0
    %v700 = vadd.f32 0.0, %v699
    %v701 = vpop.f32.mrf.mxu0
    %v702 = vpop.f32.mrf.mxu0
    %v703 = vadd.f32 0.0, %v702
    %v704 = vpop.f32.mrf.mxu0
    %705 = vdwg.mxu0
    %706 = vst [vmem:[#allocation14] sm:$0xff] %v700
    %707 = vst [vmem:[#allocation14 + $0x8] sm:$0xff] %v703
    %v708 = vlaneseq
    %v709 = vand.u32 %v708, 127
    %vm710 = vcmp.lt.s32.totalorder %v709, 3
    %v711 = vsel %vm710, %v700, -1e+30
    %v712 = vsel %vm710, %v703, -1e+30
    %713 = vmax.xlane.f32.xlu0 %v711
    %v714 = vpop.xlane.xlu0 %713
    %715 = vmax.xlane.f32.xlu0 %v712
    %v716 = vpop.xlane.xlu0 %715
    %v717 = vsub.f32 %v711, %v714
    %v718 = vsub.f32 %v712, %v716
    %v719 = vmul.f32 %v717, 1.442695
    %v720 = vpow.pop %v719
    %v721 = vmul.f32 %v718, 1.442695
    %v722 = vpow.pop %v721
    %v723 = vsel %vm710, %v720, 0.0
    %v724 = vsel %vm710, %v722, 0.0
    %725 = vadd.xlane.f32.xlu0 %v723
    %v726 = vpop.xlane.xlu0 %725
    %727 = vadd.xlane.f32.xlu0 %v724
    %v728 = vpop.xlane.xlu0 %727
    %v729 = vrcp.pop %v726
    %v730 = vrcp.pop %v728
    %v731 = vmul.f32 %v723, %v729
    %v732 = vmul.f32 %v724, %v730
    %733 = vst [vmem:[#allocation15] sm:$0xff] %v731
    %734 = vst [vmem:[#allocation15 + $0x8] sm:$0xff] %v732
    // Predicated region
    $region66: #{tpu_custom_call.1} parent=1 // pred_check
      _
    $region67: #{tpu_custom_call.1} parent=1 // pred_check_branch
      %736 = sbr.rel (0) target = $region69
    $region68: #{tpu_custom_call.1} parent=1 // pred_region
      %s738 = ssub.s32 256, 256
      %739 = vsyncadd [#allocation4], %s738
      %s740 = sshll.u32 [#allocation11], 4
      %s741 = int_to_ptr.vmem [resolvable:$true] %s740
      %746 = dma.vmem_to_hbm [thread:$0]  %s741, 256, %s11, [#allocation4], 128, 128, 8
    $region69: #{tpu_custom_call.1} parent=1 // pred_fallthru
      _
    // Predicated region
    $region70: #{tpu_custom_call.1} parent=1 // pred_check
      _
    $region71: #{tpu_custom_call.1} parent=1 // pred_check_branch
      %748 = sbr.rel (0) target = $region73
    $region72: #{tpu_custom_call.1} parent=1 // pred_region
      %s750 = ssub.s32 256, 256
      %751 = vsyncadd [#allocation13], %s750
      %s752 = sshll.u32 [#allocation12], 4
      %s753 = int_to_ptr.vmem [resolvable:$true] %s752
      %758 = dma.vmem_to_hbm [thread:$0]  %s753, 256, %s12, [#allocation13], 128, 128, 8
    $region73: #{tpu_custom_call.1} parent=1 // pred_fallthru
      _
    // Predicated region
    $region74: #{tpu_custom_call.1} parent=1 // pred_check
      _
    $region75: #{tpu_custom_call.1} parent=1 // pred_check_branch
      %760 = sbr.rel (0) target = $region77
    $region76: #{tpu_custom_call.1} parent=1 // pred_region
      %s762 = ssub.s32 256, 256
      %763 = vsyncadd [#allocation13], %s762
      %s764 = sshll.u32 [#allocation14], 4
      %s765 = int_to_ptr.vmem [resolvable:$true] %s764
      %770 = dma.vmem_to_hbm [thread:$0]  %s765, 256, %s13, [#allocation13], 128, 128, 8
    $region77: #{tpu_custom_call.1} parent=1 // pred_fallthru
      _
    // Predicated region
    $region78: #{tpu_custom_call.1} parent=1 // pred_check
      _
    $region79: #{tpu_custom_call.1} parent=1 // pred_check_branch
      %772 = sbr.rel (0) target = $region81
    $region80: #{tpu_custom_call.1} parent=1 // pred_region
      %s774 = ssub.s32 256, 256
      %775 = vsyncadd [#allocation16], %s774
      %s776 = sshll.u32 [#allocation15], 4
      %s777 = int_to_ptr.vmem [resolvable:$true] %s776
      %782 = dma.vmem_to_hbm [thread:$0]  %s777, 256, %s14, [#allocation16], 128, 128, 8
    $region81: #{tpu_custom_call.1} parent=1 // pred_fallthru
      _
    // Predicated region
    $region82: #{tpu_custom_call.1} parent=1 // pred_check
      _
    $region83: #{tpu_custom_call.1} parent=1 // pred_check_branch
      %784 = sbr.rel (0) target = $region85
    $region84: #{tpu_custom_call.1} parent=1 // pred_region
      %785 = dma.done [#allocation4], 256
    $region85: #{tpu_custom_call.1} parent=1 // pred_fallthru
      _
    // Predicated region
    $region86: #{tpu_custom_call.1} parent=1 // pred_check
      _
    $region87: #{tpu_custom_call.1} parent=1 // pred_check_branch
      %787 = sbr.rel (0) target = $region89
    $region88: #{tpu_custom_call.1} parent=1 // pred_region
      %788 = dma.done [#allocation13], 256
    $region89: #{tpu_custom_call.1} parent=1 // pred_fallthru
      _
    // Predicated region
    $region90: #{tpu_custom_call.1} parent=1 // pred_check
      _
    $region91: #{tpu_custom_call.1} parent=1 // pred_check_branch
      %790 = sbr.rel (0) target = $region93
    $region92: #{tpu_custom_call.1} parent=1 // pred_region
      %791 = dma.done [#allocation13], 256
    $region93: #{tpu_custom_call.1} parent=1 // pred_fallthru
      _
    // Predicated region
    $region94: #{tpu_custom_call.1} parent=1 // pred_check
      _
    $region95: #{tpu_custom_call.1} parent=1 // pred_check_branch
      %793 = sbr.rel (0) target = $region97
    $region96: #{tpu_custom_call.1} parent=1 // pred_region
      %794 = dma.done [#allocation16], 256
    $region97: #{tpu_custom_call.1} parent=1 // pred_fallthru
      _
    %795 = vsyncpa [#allocation3], 1
    %796 = vsyncpa [#allocation6], 1
    %797 = vsyncpa [#allocation9], 1
    %798 = vsyncpa [#allocation4], 1
    %799 = vsyncpa [#allocation13], 1
    %800 = vsyncpa [#allocation16], 1

</llo_original>
